<compile_context>
chip_gen: v5e
topology: v5e:2x2
jax: 0.10.0
libtpu: 0.0.40
codegen_flags: <defaults>
</compile_context>

<pallas_src>
import functools

import jax
import jax.numpy as jnp
from jax.experimental import pallas as pl
from jax.experimental.pallas import tpu as pltpu

KERNEL_SIZE = 3
GRAY_COEFFS = (0.2989, 0.587, 0.114)  # torchvision rgb_to_grayscale coefficients


def _blur_kernel(x_ref, o_ref, gpad_ref, vpad_ref, *, H, W, K, NB):
    """Grayscale -> KxK all-ones conv (zero pad) -> replicate to 3 channels.

    Flattened spatial axis L = H*W sits on lanes, so loads/stores are lane-dense.

    x_ref:    (NB, 3, L)        input RGB block
    o_ref:    (NB, 3, L)        output block (blurred gray replicated x3)
    gpad_ref: (NB, L + 2*M)     VMEM scratch, M = (K//2)*W  (vertical/H halo)
    vpad_ref: (NB, L + 2*pad)   VMEM scratch                (horizontal/W halo)
    """
    pad = K // 2
    L = H * W
    M = pad * W

    # Grayscale (elementwise, VPU).
    gray = (GRAY_COEFFS[0] * x_ref[:, 0, :]
            + GRAY_COEFFS[1] * x_ref[:, 1, :]
            + GRAY_COEFFS[2] * x_ref[:, 2, :])                       # (NB, L) f32

    # Zero-padded flat copy. Zero margins of M = pad*W flat elements implement the
    # conv2d zero padding along H (luma of zero padding is zero, so this is exact).
    gpad_ref[...] = jnp.zeros_like(gpad_ref)
    gpad_ref[:, pl.ds(M, L)] = gray

    # Vertical pass: a +/-di row shift is a +/-di*W flat shift. No masks needed —
    # the zero margins supply the H padding.
    vsum = gpad_ref[:, pl.ds(M, L)]
    for di in range(1, pad + 1):
        vsum = vsum + gpad_ref[:, pl.ds(M - di * W, L)]
        vsum = vsum + gpad_ref[:, pl.ds(M + di * W, L)]

    # Horizontal pass: a +/-dj column shift is a +/-dj flat shift; row wrap-around
    # is killed with a column mask (== zero padding along W).
    vpad_ref[...] = jnp.zeros_like(vpad_ref)
    vpad_ref[:, pl.ds(pad, L)] = vsum

    col = jax.lax.broadcasted_iota(jnp.int32, (NB, L), 1) % W
    out = vpad_ref[:, pl.ds(pad, L)]
    for dj in range(1, pad + 1):
        left = vpad_ref[:, pl.ds(pad - dj, L)]    # reads column j - dj
        right = vpad_ref[:, pl.ds(pad + dj, L)]   # reads column j + dj
        out = out + jnp.where(col >= dj, left, 0.0)
        out = out + jnp.where(col < W - dj, right, 0.0)

    # .repeat(1, 3, 1, 1): one sublane broadcast, one lane-dense full-block store.
    out = out.astype(o_ref.dtype)
    o_ref[...] = jnp.broadcast_to(out[:, None, :], (NB, 3, L))


def _per_image_vmem_bytes(H, W, pad):
    L = H * W
    M = pad * W
    # double-buffered in + out blocks, plus the two f32 scratches
    return 4 * (2 * 2 * 3 * L + (L + 2 * M) + (L + 2 * pad))


def _choose_batch_block(N, H, W, pad, budget_bytes=24 * 1024 * 1024):
    """Images per block: as many as fit the VMEM budget, dividing N (full blocks)."""
    per_img = _per_image_vmem_bytes(H, W, pad)
    nb = max(1, min(N, budget_bytes // max(per_img, 1)))
    while nb > 1 and N % nb != 0:
        nb -= 1
    return nb


def gaussian_blur_layer(x, kernel_size=KERNEL_SIZE):
    """Pallas TPU implementation of GaussianBlurLayer.forward. x: (N, 3, H, W)."""
    N, C, H, W = x.shape
    assert C == 3, "expects an RGB NCHW input"
    assert kernel_size % 2 == 1, "odd kernel_size required (matches 'same' padding)"
    pad = kernel_size // 2
    L = H * W
    M = pad * W

    x = x.astype(jnp.float32)
    # Free (contiguous) reshape: put H*W on the lane axis — no extra HBM pass.
    x_flat = x.reshape(N, C, L)

    nb = _choose_batch_block(N, H, W, pad)
    grid = (N // nb,)

    per_img = _per_image_vmem_bytes(H, W, pad)
    vmem_limit = int(min(32 * 1024 * 1024, max(8 * 1024 * 1024, 2 * nb * per_img)))

    kernel = functools.partial(_blur_kernel, H=H, W=W, K=kernel_size, NB=nb)

    out_flat = pl.pallas_call(
        kernel,
        out_shape=jax.ShapeDtypeStruct((N, 3, L), jnp.float32),
        grid_spec=pltpu.PrefetchScalarGridSpec(
            num_scalar_prefetch=0,
            grid=grid,
            in_specs=[pl.BlockSpec((nb, 3, L), lambda i: (i, 0, 0))],
            out_specs=pl.BlockSpec((nb, 3, L), lambda i: (i, 0, 0)),
            scratch_shapes=[
                pltpu.VMEM((nb, L + 2 * M), jnp.float32),
                pltpu.VMEM((nb, L + 2 * pad), jnp.float32),
            ],
        ),
        compiler_params=pltpu.CompilerParams(
            dimension_semantics=("parallel",),
            vmem_limit_bytes=vmem_limit,
        ),
        cost_estimate=pl.CostEstimate(
            flops=int(N * L * (5 + 6 * pad)),
            transcendentals=0,
            bytes_accessed=int(2 * 4 * 3 * N * L),  # ~24 B per pixel (read + write)
        ),
    )(x_flat)

    # TODO(synk): images too large for a per-image VMEM block would need spatial (H)
    # tiling with explicit halo DMA; not required for the shapes exercised here.
    return out_flat.reshape(N, 3, H, W)


def _reference(x, kernel_size=KERNEL_SIZE):
    """Pure-JAX reference of the PyTorch forward for verification."""
    pad = kernel_size // 2
    gray = (GRAY_COEFFS[0] * x[:, 0]
            + GRAY_COEFFS[1] * x[:, 1]
            + GRAY_COEFFS[2] * x[:, 2])                     # (N, H, W)
    gp = jnp.pad(gray, ((0, 0), (pad, pad), (pad, pad)))
    N, H, W = gray.shape
    acc = jnp.zeros_like(gray)
    for di in range(kernel_size):
        for dj in range(kernel_size):
            acc = acc + gp[:, di:di + H, dj:dj + W]
    return jnp.broadcast_to(acc[:, None, :, :], (N, 3, H, W))


if __name__ == "__main__":
    key = jax.random.PRNGKey(0)
    N, C, H, W = 2, 3, 16, 16
    x = jax.random.uniform(key, (N, C, H, W), dtype=jnp.float32)

    out = gaussian_blur_layer(x)
    out = jax.block_until_ready(out)

    ref = _reference(x)
    assert out.shape == (N, 3, H, W)
    assert jnp.allclose(out, ref, atol=1e-5, rtol=1e-5), "mismatch vs reference"

    print("KERNEL_OK")
</pallas_src>

<mosaic_0001>
module attributes {stable_mosaic.version = 11 : i64} {
  func.func @_blur_kernel(%arg0: i32, %arg1: memref<2x3x256xf32, #tpu.memory_space<vmem>>, %arg2: memref<2x3x256xf32, #tpu.memory_space<vmem>>, %arg3: memref<2x288xf32, #tpu.memory_space<vmem>>, %arg4: memref<2x258xf32, #tpu.memory_space<vmem>>) attributes {dimension_semantics = [#tpu.dimension_semantics<parallel>], iteration_bounds = array<i64: 1>, scalar_prefetch = 0 : i64, scratch_operands = 2 : i64, tpu.core_type = #tpu.core_type<tc>, window_params = [{transform_indices = @transform_0, window_bounds = array<i64: 2, 3, 256>}, {transform_indices = @transform_1, window_bounds = array<i64: 2, 3, 256>}]} {
    %c0 = arith.constant 0 : index
    %c0_0 = arith.constant 0 : index
    %c0_1 = arith.constant 0 : index
    %0 = vector.load %arg1[%c0, %c0_0, %c0_1] : memref<2x3x256xf32, #tpu.memory_space<vmem>>, vector<2x1x256xf32>
    %1 = vector.shape_cast %0 : vector<2x1x256xf32> to vector<2x256xf32>
    %cst = arith.constant 2.989000e-01 : f32
    %2 = vector.broadcast %cst : f32 to vector<2x256xf32>
    %3 = arith.mulf %2, %1 : vector<2x256xf32>
    %c0_2 = arith.constant 0 : index
    %c1 = arith.constant 1 : index
    %c0_3 = arith.constant 0 : index
    %4 = vector.load %arg1[%c0_2, %c1, %c0_3] : memref<2x3x256xf32, #tpu.memory_space<vmem>>, vector<2x1x256xf32>
    %5 = vector.shape_cast %4 : vector<2x1x256xf32> to vector<2x256xf32>
    %cst_4 = arith.constant 5.870000e-01 : f32
    %6 = vector.broadcast %cst_4 : f32 to vector<2x256xf32>
    %7 = arith.mulf %6, %5 : vector<2x256xf32>
    %8 = arith.addf %3, %7 : vector<2x256xf32>
    %c0_5 = arith.constant 0 : index
    %c2 = arith.constant 2 : index
    %c0_6 = arith.constant 0 : index
    %9 = vector.load %arg1[%c0_5, %c2, %c0_6] : memref<2x3x256xf32, #tpu.memory_space<vmem>>, vector<2x1x256xf32>
    %10 = vector.shape_cast %9 : vector<2x1x256xf32> to vector<2x256xf32>
    %cst_7 = arith.constant 1.140000e-01 : f32
    %11 = vector.broadcast %cst_7 : f32 to vector<2x256xf32>
    %12 = arith.mulf %11, %10 : vector<2x256xf32>
    %13 = arith.addf %8, %12 : vector<2x256xf32>
    %cst_8 = arith.constant 0.000000e+00 : f32
    %14 = vector.broadcast %cst_8 : f32 to vector<2x288xf32>
    %c0_9 = arith.constant 0 : index
    %c0_10 = arith.constant 0 : index
    %15 = vector.load %arg3[%c0_9, %c0_10] : memref<2x288xf32, #tpu.memory_space<vmem>>, vector<2x288xf32>
    tpu.vector_store %arg3[%c0_9, %c0_10], %14 {strides = array<i32>} : memref<2x288xf32, #tpu.memory_space<vmem>>, vector<2x288xf32>,
    %c0_11 = arith.constant 0 : index
    %c16 = arith.constant 16 : index
    %16 = vector.load %arg3[%c0_11, %c16] : memref<2x288xf32, #tpu.memory_space<vmem>>, vector<2x256xf32>
    tpu.vector_store %arg3[%c0_11, %c16], %13 {strides = array<i32>} : memref<2x288xf32, #tpu.memory_space<vmem>>, vector<2x256xf32>,
    %c0_12 = arith.constant 0 : index
    %c16_13 = arith.constant 16 : index
    %17 = vector.load %arg3[%c0_12, %c16_13] : memref<2x288xf32, #tpu.memory_space<vmem>>, vector<2x256xf32>
    %c0_14 = arith.constant 0 : index
    %c0_15 = arith.constant 0 : index
    %18 = vector.load %arg3[%c0_14, %c0_15] : memref<2x288xf32, #tpu.memory_space<vmem>>, vector<2x256xf32>
    %19 = arith.addf %17, %18 : vector<2x256xf32>
    %c0_16 = arith.constant 0 : index
    %c32 = arith.constant 32 : index
    %20 = vector.load %arg3[%c0_16, %c32] : memref<2x288xf32, #tpu.memory_space<vmem>>, vector<2x256xf32>
    %21 = arith.addf %19, %20 : vector<2x256xf32>
    %cst_17 = arith.constant 0.000000e+00 : f32
    %22 = vector.broadcast %cst_17 : f32 to vector<2x258xf32>
    %c0_18 = arith.constant 0 : index
    %c0_19 = arith.constant 0 : index
    %23 = vector.load %arg4[%c0_18, %c0_19] : memref<2x258xf32, #tpu.memory_space<vmem>>, vector<2x258xf32>
    tpu.vector_store %arg4[%c0_18, %c0_19], %22 {strides = array<i32>} : memref<2x258xf32, #tpu.memory_space<vmem>>, vector<2x258xf32>,
    %c0_20 = arith.constant 0 : index
    %c1_21 = arith.constant 1 : index
    %24 = vector.load %arg4[%c0_20, %c1_21] : memref<2x258xf32, #tpu.memory_space<vmem>>, vector<2x256xf32>
    tpu.vector_store %arg4[%c0_20, %c1_21], %21 {strides = array<i32>} : memref<2x258xf32, #tpu.memory_space<vmem>>, vector<2x256xf32>,
    %25 = tpu.iota {dimensions = array<i32: 1>} : vector<2x256xi32>
    %c16_i32 = arith.constant 16 : i32
    %c0_i32 = arith.constant 0 : i32
    %26 = arith.cmpi eq, %c16_i32, %c0_i32 : i32
    %c1_i32 = arith.constant 1 : i32
    %27 = arith.select %26, %c1_i32, %c16_i32 : i32
    %28 = vector.broadcast %27 : i32 to vector<2x256xi32>
    %29 = arith.remsi %25, %28 : vector<2x256xi32>
    %c0_i32_22 = arith.constant 0 : i32
    %30 = vector.broadcast %c0_i32_22 : i32 to vector<2x256xi32>
    %31 = arith.cmpi ne, %29, %30 : vector<2x256xi32>
    %c0_i32_23 = arith.constant 0 : i32
    %32 = vector.broadcast %c0_i32_23 : i32 to vector<2x256xi32>
    %33 = arith.cmpi slt, %29, %32 : vector<2x256xi32>
    %c0_i32_24 = arith.constant 0 : i32
    %34 = arith.cmpi slt, %27, %c0_i32_24 : i32
    %35 = vector.broadcast %34 : i1 to vector<2x256xi1>
    %36 = vector.broadcast %35 : vector<2x256xi1> to vector<2x256xi1>
    %37 = arith.xori %33, %36 : vector<2x256xi1>
    %38 = arith.andi %37, %31 : vector<2x256xi1>
    %39 = vector.broadcast %27 : i32 to vector<2x256xi32>
    %40 = arith.addi %29, %39 : vector<2x256xi32>
    %41 = arith.select %38, %40, %29 : vector<2x256xi1>, vector<2x256xi32>
    %c0_25 = arith.constant 0 : index
    %c1_26 = arith.constant 1 : index
    %42 = vector.load %arg4[%c0_25, %c1_26] : memref<2x258xf32, #tpu.memory_space<vmem>>, vector<2x256xf32>
    %c0_27 = arith.constant 0 : index
    %c0_28 = arith.constant 0 : index
    %43 = vector.load %arg4[%c0_27, %c0_28] : memref<2x258xf32, #tpu.memory_space<vmem>>, vector<2x256xf32>
    %c0_29 = arith.constant 0 : index
    %c2_30 = arith.constant 2 : index
    %44 = vector.load %arg4[%c0_29, %c2_30] : memref<2x258xf32, #tpu.memory_space<vmem>>, vector<2x256xf32>
    %c1_i32_31 = arith.constant 1 : i32
    %45 = vector.broadcast %c1_i32_31 : i32 to vector<2x256xi32>
    %46 = arith.cmpi sge, %41, %45 : vector<2x256xi32>
    %cst_32 = arith.constant 0.000000e+00 : f32
    %47 = vector.broadcast %cst_32 : f32 to vector<2x256xf32>
    %48 = arith.select %46, %43, %47 : vector<2x256xi1>, vector<2x256xf32>
    %49 = arith.addf %42, %48 : vector<2x256xf32>
    %c15_i32 = arith.constant 15 : i32
    %50 = vector.broadcast %c15_i32 : i32 to vector<2x256xi32>
    %51 = arith.cmpi slt, %41, %50 : vector<2x256xi32>
    %cst_33 = arith.constant 0.000000e+00 : f32
    %52 = vector.broadcast %cst_33 : f32 to vector<2x256xf32>
    %53 = arith.select %51, %44, %52 : vector<2x256xi1>, vector<2x256xf32>
    %54 = arith.addf %49, %53 : vector<2x256xf32>
    %55 = vector.shape_cast %54 : vector<2x256xf32> to vector<2x1x256xf32>
    %56 = vector.shape_cast %55 : vector<2x1x256xf32> to vector<2x1x256xf32>
    %57 = vector.broadcast %56 : vector<2x1x256xf32> to vector<2x3x256xf32>
    %c0_34 = arith.constant 0 : index
    %c0_35 = arith.constant 0 : index
    %c0_36 = arith.constant 0 : index
    %58 = vector.load %arg2[%c0_34, %c0_35, %c0_36] : memref<2x3x256xf32, #tpu.memory_space<vmem>>, vector<2x3x256xf32>
    tpu.vector_store %arg2[%c0_34, %c0_35, %c0_36], %57 {strides = array<i32>} : memref<2x3x256xf32, #tpu.memory_space<vmem>>, vector<2x3x256xf32>,
    return
  }
  func.func @transform_0(%arg0: i32) -> (i32, i32, i32) {
    %c0_i32 = arith.constant 0 : i32
    %c0_i32_0 = arith.constant 0 : i32
    %c0_i32_1 = arith.constant 0 : i32
    return %arg0, %c0_i32, %c0_i32_0 : i32, i32, i32
  }
  func.func @transform_1(%arg0: i32) -> (i32, i32, i32) {
    %c0_i32 = arith.constant 0 : i32
    %c0_i32_0 = arith.constant 0 : i32
    %c0_i32_1 = arith.constant 0 : i32
    return %arg0, %c0_i32, %c0_i32_0 : i32, i32, i32
  }
}

</mosaic_0001>

<llo_original>
// kernel: tpu_custom_call.1
$region0: #{tpu_custom_call.1}
  #allocation0 [shape = 'u32[]', space=smem, size = 0x4, offset = 0x4, fixed_abs, tag = 'smem constant byte address 0x4 - core index']
  #allocation1 [shape = 'u32[72,128]{1,0:T(1,128)}', space=vmem, size = 0x9000, scoped, tag = 'internal scratch']
  #allocation2 [shape = 'f32[2,288]{1,0:T(2,128)}', space=vmem, size = 0xc00, scoped, tag = 'scratch operand']
  #allocation3 [shape = 'f32[2,258]{1,0:T(2,128)}', space=vmem, size = 0xc00, scoped, tag = 'scratch operand']
  %s0 = inlined_call_operand.vmem [shape: f32[2,3,256], index: 0, kind: input, shape index: {}]
  %s1 = inlined_call_operand.vmem [shape: f32[2,3,256], index: 1, kind: output, shape index: {}]
  %s2 = sld [smem:[#allocation0]]
  $region14: #{tpu_custom_call.1} parent=0
    _
  %s4 = ssub.s32 1, %s2
  %s5 = scalar_select 0, %s4, %s2
  // Predicated region
  $region2: #{tpu_custom_call.1} parent=0 // pred_check
    _
  $region3: #{tpu_custom_call.1} parent=0 // pred_check_branch
    %7 = sbr.rel (0) target = $region5
  $region4: #{tpu_custom_call.1} parent=0 // pred_region
    _
  $region5: #{tpu_custom_call.1} parent=0 // pred_fallthru
    _
  %v8 = vld [vmem:[%s0] ss:$4 sm:$0x3]
  %s9 = scalar_lea.vmem %s0, 8
  %v10 = vld [vmem:[%s9] ss:$4 sm:$0x3]
  %v11 = vmul.f32 %v8, 0.2989
  %v12 = vmul.f32 %v10, 0.2989
  %s13 = scalar_lea.vmem %s0, 1
  %v14 = vld [vmem:[%s13] ss:$4 sm:$0x3]
  %s15 = scalar_lea.vmem %s0, 9
  %v16 = vld [vmem:[%s15] ss:$4 sm:$0x3]
  %v17 = vmul.f32 %v14, 0.587
  %v18 = vmul.f32 %v16, 0.587
  %v19 = vadd.f32 %v11, %v17
  %v20 = vadd.f32 %v12, %v18
  %s21 = scalar_lea.vmem %s0, 2
  %v22 = vld [vmem:[%s21] ss:$4 sm:$0x3]
  %s23 = scalar_lea.vmem %s0, 10
  %v24 = vld [vmem:[%s23] ss:$4 sm:$0x3]
  %v25 = vmul.f32 %v22, 0.114
  %v26 = vmul.f32 %v24, 0.114
  %v27 = vadd.f32 %v19, %v25
  %v28 = vadd.f32 %v20, %v26
  %vm29 = vcmask 1041408
  %vm30 = vcmask 1043458
  %vm31 = vmor %vm30, %vm29
  %vm32 = vcmask 259076
  %vm33 = vmor %vm32, %vm31
  %34 = vst.msk [vmem:[#allocation2] sm:$0x3f] %vm33, 0.0
  %37 = vst [vmem:[#allocation1] ss:$2 sm:$0xff] %v27
  %s38 = scalar_lea.vmem [#allocation1], 1
  %39 = vst [vmem:[%s38] ss:$2 sm:$0xff] %v28
  %v40 = vld [vmem:[#allocation1] sm:$0xff]
  %41 = vrot.lane.b32.xlu0 %v40, 16
  %v42 = vpop.permute.xlu0 %41
  %v43 = vrot.slane %v42, 6
  %vm44 = vcmask 130048
  %v45 = vsel %vm44, %v43, %v42
  %vm47 = vcmask 1041536
  %vm48 = vmor %vm30, %vm47
  %vm49 = vcmask 128004
  %vm50 = vmor %vm49, %vm48
  %51 = vst.msk [vmem:[#allocation2] sm:$0x3f] %vm50, %v45
  %v52 = vld [vmem:[#allocation2] sm:$0x3f]
  %v53 = vld [vmem:[#allocation2] sm:$0xf]
  %55 = vrot.lane.b32.xlu0 %v53, 16
  %v56 = vpop.permute.xlu0 %55
  %v57 = vrot.slane %v56, 6
  %v58 = vsel %vm44, %v57, %v56
  %v60 = vadd.f32 %v52, %v58
  %62 = vrot.lane.b32.xlu0 %v52, 112
  %v63 = vpop.permute.xlu0 %62
  %v64 = vrot.slane %v63, 2
  %vm65 = vcmask 916480
  %v66 = vsel %vm65, %v63, %v64
  %v68 = vadd.f32 %v60, %v66
  %vm69 = vcmask 13316
  %vm70 = vmor %vm69, %vm31
  %71 = vst.msk [vmem:[#allocation3] sm:$0x3f] %vm70, 0.0
  %73 = vrot.lane.b32.xlu0 %v68, 113
  %v74 = vpop.permute.xlu0 %73
  %v75 = vrot.slane %v74, 2
  %vm76 = vcmask 924672
  %v77 = vsel %vm76, %v74, %v75
  %vm79 = vcmask 1041416
  %vm80 = vmor %vm30, %vm79
  %vm81 = vcmask 5124
  %vm82 = vmor %vm81, %vm80
  %83 = vst.msk [vmem:[#allocation3] sm:$0x3f] %vm82, %v77
  %v84 = vlaneseq
  %v85 = vand.u32 %v84, 127
  %v86 = vadd.s32 %v85, 128
  %vm87 = vcmp.lt.s32.totalorder %v85, 0
  %v88 = vsub.s32 0, %v85
  %v89 = vsel %vm87, %v88, %v85
  %v90 = vshrl.u32 %v89, 4
  %v91 = vand.u32 %v89, 15
  %v92 = vsub.s32 0, %v91
  %v93 = vsel %vm87, %v92, %v91
  %vm94 = vcmp.lt.s32.totalorder %v86, 0
  %v95 = vsub.s32 0, %v86
  %v96 = vsel %vm94, %v95, %v86
  %v97 = vshrl.u32 %v96, 4
  %v98 = vand.u32 %v96, 15
  %v99 = vsub.s32 0, %v98
  %v100 = vsel %vm94, %v99, %v98
  %vm101 = vcmp.ne.s32.totalorder %v93, 0
  %vm102 = vcmp.ne.s32.totalorder %v100, 0
  %vm103 = vcmp.lt.s32.totalorder %v93, 0
  %vm104 = vcmp.lt.s32.totalorder %v100, 0
  %vm105 = vmand %vm103, %vm101
  %vm106 = vmand %vm104, %vm102
  %v107 = vadd.s32 %v93, 16
  %v108 = vadd.s32 %v100, 16
  %v109 = vsel %vm105, %v107, %v93
  %v110 = vsel %vm106, %v108, %v100
  %v111 = vld [vmem:[#allocation3] sm:$0x3f]
  %v112 = vld [vmem:[#allocation3] sm:$0xf]
  %vm113 = vcmp.ge.s32.totalorder %v109, 1
  %vm114 = vcmp.ge.s32.totalorder %v110, 1
  %116 = vst [vmem:[#allocation1] ss:$4 sm:$0xff] %v112
  %v117 = vld.sshfl [vmem:[#allocation1] sm:$0xff pattern:$0x73625140]
  %v118 = vld.sshfl [vmem:[#allocation1 + $0x8] sm:$0xff pattern:$0x73625140]
  %v121 = vsel %vm113, %v117, 0.0
  %v122 = vsel %vm114, %v118, 0.0
  %v125 = vrot.slane %v122, 6
  %v126 = vsel %vm29, %v121, %v125
  %127 = vrot.lane.b32.xlu0 %v126, 1
  %v128 = vpop.permute.xlu0 %127
  %v129 = vrot.slane %v128, 6
  %vm130 = vcmask 7168
  %v131 = vsel %vm130, %v129, %v128
  %v133 = vadd.f32 %v111, %v131
  %vm134 = vcmp.lt.s32.totalorder %v109, 15
  %vm135 = vcmp.lt.s32.totalorder %v110, 15
  %137 = vst [vmem:[#allocation1] ss:$4 sm:$0xff] %v111
  %v138 = vld.sshfl [vmem:[#allocation1] sm:$0xff pattern:$0x73625140]
  %v139 = vld.sshfl [vmem:[#allocation1 + $0x8] sm:$0xff pattern:$0x73625140]
  %v140 = vld.sshfl [vmem:[#allocation1 + $0x10] sm:$0xff pattern:$0x73625140]
  %141 = vrot.lane.b32.xlu0 %v138, 126
  %v142 = vpop.permute.xlu0 %141
  %143 = vrot.lane.b32.xlu0 %v139, 126
  %v144 = vpop.permute.xlu0 %143
  %145 = vrot.lane.b32.xlu0 %v140, 126
  %v146 = vpop.permute.xlu0 %145
  %vm147 = vcmask 1031168
  %v148 = vsel %vm147, %v142, %v144
  %v149 = vsel %vm147, %v144, %v146
  %v152 = vsel %vm134, %v148, 0.0
  %v153 = vsel %vm135, %v149, 0.0
  %v156 = vrot.slane %v153, 6
  %v157 = vsel %vm29, %v152, %v156
  %158 = vrot.lane.b32.xlu0 %v157, 1
  %v159 = vpop.permute.xlu0 %158
  %v160 = vrot.slane %v159, 6
  %v161 = vsel %vm130, %v160, %v159
  %v163 = vadd.f32 %v133, %v161
  %v165 = vrot.slane %v163, 1
  %v166 = vrot.slane %v163, 2
  %v167 = vrot.slane %v163, 3
  %vm168 = vcmask 1040384
  %v169 = vsel %vm168, %v163, %v165
  %vm170 = vcmask 1042434
  %v171 = vsel %vm170, %v166, %v167
  %v172 = vsel %vm29, %v169, %v171
  %vm173 = vcmask 1041409
  %v174 = vsel %vm173, %v163, %v165
  %vm175 = vcmask 1043459
  %v176 = vsel %vm175, %v166, %v167
  %vm177 = vcmask 1042433
  %v178 = vsel %vm177, %v174, %v176
  %v179 = vrot.slane %v178, 1
  %v180 = vperm.slane %v172, 0
  %v181 = vperm.slane %v172, 1
  %v182 = vperm.slane %v172, 2
  %v183 = vperm.slane %v179, 0
  %v184 = vperm.slane %v179, 1
  %v185 = vperm.slane %v179, 2
  %v186 = vrot.slane %v181, 4
  %v187 = vrot.slane %v184, 4
  %vm188 = vcmask 1043456
  %v189 = vsel %vm188, %v180, %v186
  %v190 = vsel %vm188, %v183, %v187
  %191 = vrot.lane.b32.xlu0 %v189, 127
  %v192 = vpop.permute.xlu0 %191
  %193 = vrot.lane.b32.xlu0 %v182, 127
  %v194 = vpop.permute.xlu0 %193
  %195 = vrot.lane.b32.xlu0 %v190, 127
  %v196 = vpop.permute.xlu0 %195
  %197 = vrot.lane.b32.xlu0 %v185, 127
  %v198 = vpop.permute.xlu0 %197
  %v199 = vrot.slane %v192, 4
  %v200 = vrot.slane %v194, 4
  %v201 = vrot.slane %v196, 4
  %v202 = vrot.slane %v198, 4
  %v203 = vsel %vm188, %v199, %v200
  %vm204 = vcmask 1039360
  %v205 = vsel %vm204, %v192, %v203
  %v206 = vsel %vm188, %v201, %v202
  %v207 = vsel %vm204, %v196, %v206
  %210 = vst [vmem:[%s1] sm:$0x77] %v205
  %211 = vst [vmem:[%s1 + $0x8] sm:$0x77] %v207
  // Predicated region
  $region6: #{tpu_custom_call.1} parent=0 // pred_check
    _
  $region7: #{tpu_custom_call.1} parent=0 // pred_check_branch
    %213 = sbr.rel (0) target = $region9
  $region8: #{tpu_custom_call.1} parent=0 // pred_region
    _
  $region9: #{tpu_custom_call.1} parent=0 // pred_fallthru
    _
  // Predicated region
  $region10: #{tpu_custom_call.1} parent=0 // pred_check
    _
  $region11: #{tpu_custom_call.1} parent=0 // pred_check_branch
    %215 = sbr.rel (0) target = $region13
  $region12: #{tpu_custom_call.1} parent=0 // pred_region
    _
  $region13: #{tpu_custom_call.1} parent=0 // pred_fallthru
    _

</llo_original>
